<compile_context>
chip_gen: v7x
topology: tpu7x:2x2x1
jax: 0.10.0
libtpu: 0.0.40
codegen_flags: <defaults>
</compile_context>

<pallas_src>
import math

import jax
import jax.numpy as jnp
import numpy as np
from jax.experimental import pallas as pl
from jax.experimental.pallas import tpu as pltpu


def _cdiv(a, b):
    return (a + b - 1) // b


def _round_up(a, b):
    return _cdiv(a, b) * b


def _num_tensorcores_per_chip():
    """Best-effort guess of how many TensorCores a 'parallel' axis can span."""
    try:
        kind = jax.devices()[0].device_kind.lower()
    except Exception:
        return 1
    # Megacore / dual-TensorCore parts (v4, v5p, v7x). v5e/v6e have one TC.
    if ("v4" in kind) or ("v5p" in kind) or ("7" in kind):
        return 2
    return 1


def _adaptive_bce_kernel(out_ref, tgt_ref, part_ref, acc_ref, xt_ref):
    """One (tile_b, tile_c) logits tile of BCE-with-logits partial sums.

    out_ref : (tile_b, tile_c) logits tile, native dtype (upcast on the VPU)
    tgt_ref : (1, tile_b)      f32 lane-dense target tile
    part_ref: (1, 1)           f32 per-(split, c-tile) partial sum (SMEM)
    acc_ref : (8, tile_c)      f32 accumulator for max(x,0)+log1p(exp(-|x|))
    xt_ref  : (1, tile_c)      f32 accumulator for sum_b t_b * x[b, :] (MXU)
    """
    b = pl.program_id(2)                       # row-reduction axis (innermost)

    @pl.when(b == 0)
    def _():
        acc_ref[...] = jnp.zeros_like(acc_ref)
        xt_ref[...] = jnp.zeros_like(xt_ref)

    x = out_ref[...].astype(jnp.float32)       # (tile_b, tile_c)
    t = tgt_ref[...]                           # (1, tile_b), already f32

    # VPU/EUP part of the numerically-stable BCEWithLogitsLoss formula.
    pos = jnp.maximum(x, 0.0) + jnp.log1p(jnp.exp(-jnp.abs(x)))
    tb, tc = pos.shape
    # VPU-only accumulation: fold 8-row groups into the (8, tile_c) vreg acc.
    acc_ref[...] += pos.reshape(tb // 8, 8, tc).sum(axis=0)

    # -x*t term: (1, tile_b) @ (tile_b, tile_c) on the otherwise-idle MXU.
    # HIGHEST keeps full f32 contraction precision (MXU slot is free anyway).
    xt_ref[...] += jnp.dot(t, x, preferred_element_type=jnp.float32,
                           precision=jax.lax.Precision.HIGHEST)

    @pl.when(b == pl.num_programs(2) - 1)
    def _():
        # Single cross-lane reduce per (split, c-tile), done once in epilogue.
        part_ref[0, 0] = jnp.sum(acc_ref[...]) - jnp.sum(xt_ref[...])


def adaptive_bce_with_logits_loss(output, target, *,
                                  tile_budget_bytes=4 * 1024 * 1024,
                                  num_core_splits=None):
    """AdaptiveLoss(nn.BCEWithLogitsLoss())(output, target) -> scalar f32."""
    B, C = output.shape
    assert target.shape == (B,)
    itemsize = jnp.dtype(output.dtype).itemsize

    if num_core_splits is None:
        num_core_splits = _num_tensorcores_per_chip()
    num_core_splits = max(1, int(num_core_splits))

    # ---- Column tiling: only if a 128-row slab of full C would blow the
    # per-buffer budget (adaptive-softmax-sized heads). ----
    if 128 * C * itemsize <= tile_budget_bytes:
        tile_c, c_pad = C, C                       # full C per block, no pad
    else:
        tile_c = max(128, ((tile_budget_bytes // (128 * itemsize)) // 128) * 128)
        c_pad = _round_up(C, tile_c)
    n_c = c_pad // tile_c

    # ---- Row tiling: per-row cost counts the logits row plus the 8-sublane
    # padded f32 target row, so target buffers are part of the budget. ----
    bytes_per_row = tile_c * itemsize + 8 * 4
    tile_b_cap = max(128, ((tile_budget_bytes // bytes_per_row) // 128) * 128)
    b8 = _round_up(B, 8)
    if b8 <= tile_b_cap:
        splits, bt, tile_b = 1, 1, b8              # single row tile (min pad)
    else:
        tile_b = tile_b_cap                        # multiple of 128 (lane rule)
        splits = num_core_splits if b8 >= num_core_splits * tile_b else 1
        bt = _cdiv(_cdiv(b8, splits), tile_b)
    b_pad = splits * bt * tile_b

    # target[:, None].float(): kept 1-D and lane-dense; the expand_as
    # broadcast is realized by the in-kernel matmul against the logits tile.
    tgt = target.astype(jnp.float32).reshape(1, B)
    if b_pad != B:
        tgt = jnp.pad(tgt, ((0, 0), (0, b_pad - B)))
    if (b_pad, c_pad) != (B, C):
        output = jnp.pad(output, ((0, b_pad - B), (0, c_pad - C)))

    # Explicit VMEM budget: double-buffered logits + targets, plus scratch.
    vmem_needed = (2 * tile_b * tile_c * itemsize      # logits, double-buffered
                   + 2 * 8 * tile_b * 4                # target, sublane-padded
                   + 2 * 8 * tile_c * 4)               # acc + xt scratch
    vmem_limit = int(min(48 * 2**20, max(16 * 2**20, vmem_needed + (4 << 20))))

    cost = pl.CostEstimate(
        flops=7 * B * C,
        transcendentals=2 * B * C,
        bytes_accessed=int(B * C * itemsize + 4 * B + 4 * splits * n_c))

    partials = pl.pallas_call(
        _adaptive_bce_kernel,
        out_shape=jax.ShapeDtypeStruct((splits, n_c), jnp.float32),
        grid_spec=pltpu.PrefetchScalarGridSpec(
            num_scalar_prefetch=0,
            grid=(splits, n_c, bt),                    # reduction (rows) last
            in_specs=[
                pl.BlockSpec((tile_b, tile_c),
                             lambda s, c, b, bt=bt: (s * bt + b, c)),
                pl.BlockSpec((1, tile_b),
                             lambda s, c, b, bt=bt: (0, s * bt + b)),
            ],
            out_specs=pl.BlockSpec((1, 1), lambda s, c, b: (s, c),
                                   memory_space=pltpu.SMEM),
            scratch_shapes=[pltpu.VMEM((8, tile_c), jnp.float32),
                            pltpu.VMEM((1, tile_c), jnp.float32)],
        ),
        compiler_params=pltpu.CompilerParams(
            dimension_semantics=("parallel", "arbitrary", "arbitrary"),
            vmem_limit_bytes=vmem_limit,
        ),
        cost_estimate=cost,
    )(output, tgt)

    # Padded logits/targets are exact zeros: each padded element contributes
    # exactly ln(2) to the softplus sum and exactly 0 to the x*t dot, so the
    # padding is removed analytically (no per-step mask work in the kernel)
    # while the mean divisor stays the true B*C.
    total = jnp.sum(partials)
    n_padded = b_pad * c_pad - B * C
    if n_padded:
        total = total - jnp.float32(n_padded * math.log(2.0))
    return total / jnp.float32(B * C)


def _reference(output, target):
    x = output.astype(jnp.float32)
    t = jnp.broadcast_to(target.astype(jnp.float32)[:, None], x.shape)
    per = jnp.maximum(x, 0.0) - x * t + jnp.log1p(jnp.exp(-jnp.abs(x)))
    return jnp.mean(per)


if __name__ == "__main__":
    key = jax.random.PRNGKey(0)
    keys = jax.random.split(key, 8)

    def check(name, out, tgt, rtol, atol, **kw):
        loss = adaptive_bce_with_logits_loss(out, tgt, **kw)
        jax.block_until_ready(loss)
        ref = _reference(out, tgt)
        assert np.allclose(np.asarray(loss), np.asarray(ref),
                           rtol=rtol, atol=atol), (name, loss, ref)

    # Case 1: f32 logits, row count already a multiple of 8 (no padding).
    out1 = jax.random.normal(keys[0], (16, 128), dtype=jnp.float32)
    tgt1 = jax.random.bernoulli(keys[1], 0.5, (16,)).astype(jnp.int32)
    check("f32", out1, tgt1, 2e-5, 2e-5)

    # Case 2: bf16 logits streamed natively + ragged B (zero-pad correction).
    out2 = jax.random.normal(keys[2], (20, 128), dtype=jnp.bfloat16)
    tgt2 = jax.random.bernoulli(keys[3], 0.5, (20,)).astype(jnp.int32)
    check("bf16", out2, tgt2, 1e-4, 1e-5)

    # Case 3: ragged B, non-128 C (block covers full C) and float targets.
    out3 = jax.random.normal(keys[4], (12, 72), dtype=jnp.float32)
    tgt3 = jax.random.bernoulli(keys[5], 0.5, (12,)).astype(jnp.float32)
    check("oddC", out3, tgt3, 2e-5, 2e-5)

    # Case 4: tiny tile budget + forced 2-way split -> multi-step reduction
    # grid with per-split partials (exercises accumulate/finalize pipeline).
    out4 = jax.random.normal(keys[6], (600, 128), dtype=jnp.float32)
    tgt4 = jax.random.bernoulli(keys[7], 0.5, (600,)).astype(jnp.int32)
    check("multi-tile", out4, tgt4, 2e-5, 2e-5,
          tile_budget_bytes=128 * 1024, num_core_splits=2)

    print("KERNEL_OK")
</pallas_src>

<mosaic_0001>
module attributes {stable_mosaic.version = 11 : i64} {
  func.func @_adaptive_bce_kernel(%arg0: i32, %arg1: i32, %arg2: i32, %arg3: memref<16x128xf32, #tpu.memory_space<vmem>>, %arg4: memref<1x16xf32, #tpu.memory_space<vmem>>, %arg5: memref<1x1xf32, #tpu.memory_space<smem>>, %arg6: memref<8x128xf32, #tpu.memory_space<vmem>>, %arg7: memref<1x128xf32, #tpu.memory_space<vmem>>) attributes {dimension_semantics = [#tpu.dimension_semantics<parallel>, #tpu.dimension_semantics<arbitrary>, #tpu.dimension_semantics<arbitrary>], iteration_bounds = array<i64: 1, 1, 1>, scalar_prefetch = 0 : i64, scratch_operands = 2 : i64, tpu.core_type = #tpu.core_type<tc>, window_params = [{transform_indices = @transform_0, window_bounds = array<i64: 16, 128>}, {transform_indices = @transform_1, window_bounds = array<i64: 1, 16>}, {transform_indices = @transform_2, window_bounds = array<i64: 1, 1>}]} {
    %c0_i32 = arith.constant 0 : i32
    %0 = arith.cmpi eq, %arg2, %c0_i32 : i32
    %1 = arith.extui %0 : i1 to i32
    %c0_i32_0 = arith.constant 0 : i32
    %2 = arith.cmpi ne, %1, %c0_i32_0 : i32
    scf.if %2 {
      %cst_17 = arith.constant 0.000000e+00 : f32
      %25 = vector.broadcast %cst_17 : f32 to vector<8x128xf32>
      %c0_18 = arith.constant 0 : index
      %c0_19 = arith.constant 0 : index
      %26 = vector.load %arg6[%c0_18, %c0_19] : memref<8x128xf32, #tpu.memory_space<vmem>>, vector<8x128xf32>
      tpu.vector_store %arg6[%c0_18, %c0_19], %25 {strides = array<i32>} : memref<8x128xf32, #tpu.memory_space<vmem>>, vector<8x128xf32>,
      %cst_20 = arith.constant 0.000000e+00 : f32
      %27 = vector.broadcast %cst_20 : f32 to vector<1x128xf32>
      %c0_21 = arith.constant 0 : index
      %c0_22 = arith.constant 0 : index
      %28 = vector.load %arg7[%c0_21, %c0_22] : memref<1x128xf32, #tpu.memory_space<vmem>>, vector<1x128xf32>
      tpu.vector_store %arg7[%c0_21, %c0_22], %27 {strides = array<i32>} : memref<1x128xf32, #tpu.memory_space<vmem>>, vector<1x128xf32>,
    } else {
    }
    %c0 = arith.constant 0 : index
    %c0_1 = arith.constant 0 : index
    %3 = vector.load %arg3[%c0, %c0_1] : memref<16x128xf32, #tpu.memory_space<vmem>>, vector<16x128xf32>
    %c0_2 = arith.constant 0 : index
    %c0_3 = arith.constant 0 : index
    %4 = vector.load %arg4[%c0_2, %c0_3] : memref<1x16xf32, #tpu.memory_space<vmem>>, vector<1x16xf32>
    %cst = arith.constant 0.000000e+00 : f32
    %5 = vector.broadcast %cst : f32 to vector<16x128xf32>
    %6 = arith.maximumf %3, %5 : vector<16x128xf32>
    %7 = math.absf %3 : vector<16x128xf32>
    %cst_4 = arith.constant 0.000000e+00 : f32
    %8 = vector.broadcast %cst_4 : f32 to vector<16x128xf32>
    %9 = arith.subf %8, %7 : vector<16x128xf32>
    %10 = math.exp %9 : vector<16x128xf32>
    %11 = math.log1p %10 : vector<16x128xf32>
    %12 = arith.addf %6, %11 : vector<16x128xf32>
    %c0_5 = arith.constant 0 : index
    %c0_6 = arith.constant 0 : index
    %13 = vector.load %arg6[%c0_5, %c0_6] : memref<8x128xf32, #tpu.memory_space<vmem>>, vector<8x128xf32>
    %14 = vector.shape_cast %12 : vector<16x128xf32> to vector<2x8x128xf32>
    %cst_7 = arith.constant dense<0.000000e+00> : vector<8x128xf32>
    %15 = vector.multi_reduction <add>, %14, %cst_7 [0] : vector<2x8x128xf32> to vector<8x128xf32>
    %16 = arith.addf %13, %15 : vector<8x128xf32>
    %c0_8 = arith.constant 0 : index
    %c0_9 = arith.constant 0 : index
    %17 = vector.load %arg6[%c0_8, %c0_9] : memref<8x128xf32, #tpu.memory_space<vmem>>, vector<8x128xf32>
    tpu.vector_store %arg6[%c0_8, %c0_9], %16 {strides = array<i32>} : memref<8x128xf32, #tpu.memory_space<vmem>>, vector<8x128xf32>,
    %c0_10 = arith.constant 0 : index
    %c0_11 = arith.constant 0 : index
    %18 = vector.load %arg7[%c0_10, %c0_11] : memref<1x128xf32, #tpu.memory_space<vmem>>, vector<1x128xf32>
    %cst_12 = arith.constant dense<0.000000e+00> : vector<1x128xf32>
    %19 = tpu.matmul %4, %3, %cst_12 {dimension_numbers = #tpu.dot_dimension_numbers<[1], [0], [0], [1], [0, 0, 1, 1], [], []>, precision = #tpu.contract_precision<fp32>} : vector<1x16xf32>, vector<16x128xf32>, vector<1x128xf32> -> vector<1x128xf32>
    %20 = arith.addf %18, %19 : vector<1x128xf32>
    %c0_13 = arith.constant 0 : index
    %c0_14 = arith.constant 0 : index
    %21 = vector.load %arg7[%c0_13, %c0_14] : memref<1x128xf32, #tpu.memory_space<vmem>>, vector<1x128xf32>
    tpu.vector_store %arg7[%c0_13, %c0_14], %20 {strides = array<i32>} : memref<1x128xf32, #tpu.memory_space<vmem>>, vector<1x128xf32>,
    %c0_i32_15 = arith.constant 0 : i32
    %22 = arith.cmpi eq, %arg2, %c0_i32_15 : i32
    %23 = arith.extui %22 : i1 to i32
    %c0_i32_16 = arith.constant 0 : i32
    %24 = arith.cmpi ne, %23, %c0_i32_16 : i32
    scf.if %24 {
      %c0_17 = arith.constant 0 : index
      %c0_18 = arith.constant 0 : index
      %25 = vector.load %arg6[%c0_17, %c0_18] : memref<8x128xf32, #tpu.memory_space<vmem>>, vector<8x128xf32>
      %26 = vector.shape_cast %25 : vector<8x128xf32> to vector<1x8x128xf32>
      %cst_19 = arith.constant dense<0.000000e+00> : vector<1xf32>
      %27 = vector.multi_reduction <add>, %26, %cst_19 [1, 2] : vector<1x8x128xf32> to vector<1xf32>
      %28 = vector.shape_cast %27 : vector<1xf32> to vector<1x1x1xf32>
      %29 = vector.extract %28[0, 0, 0] : f32 from vector<1x1x1xf32>
      %c0_20 = arith.constant 0 : index
      %c0_21 = arith.constant 0 : index
      %30 = vector.load %arg7[%c0_20, %c0_21] : memref<1x128xf32, #tpu.memory_space<vmem>>, vector<1x128xf32>
      %31 = vector.shape_cast %30 : vector<1x128xf32> to vector<1x1x128xf32>
      %cst_22 = arith.constant dense<0.000000e+00> : vector<1xf32>
      %32 = vector.multi_reduction <add>, %31, %cst_22 [1, 2] : vector<1x1x128xf32> to vector<1xf32>
      %33 = vector.shape_cast %32 : vector<1xf32> to vector<1x1x1xf32>
      %34 = vector.extract %33[0, 0, 0] : f32 from vector<1x1x1xf32>
      %35 = arith.subf %29, %34 : f32
      %c0_23 = arith.constant 0 : index
      %c0_24 = arith.constant 0 : index
      %36 = memref.load %arg5[%c0_23, %c0_24] : memref<1x1xf32, #tpu.memory_space<smem>>
      memref.store %35, %arg5[%c0_23, %c0_24] : memref<1x1xf32, #tpu.memory_space<smem>>
    } else {
    }
    return
  }
  func.func @transform_0(%arg0: i32, %arg1: i32, %arg2: i32) -> (i32, i32) {
    %c1_i32 = arith.constant 1 : i32
    %0 = arith.muli %arg0, %c1_i32 : i32
    %1 = arith.addi %0, %arg2 : i32
    %c0_i32 = arith.constant 0 : i32
    return %1, %arg1 : i32, i32
  }
  func.func @transform_1(%arg0: i32, %arg1: i32, %arg2: i32) -> (i32, i32) {
    %c1_i32 = arith.constant 1 : i32
    %0 = arith.muli %arg0, %c1_i32 : i32
    %1 = arith.addi %0, %arg2 : i32
    %c0_i32 = arith.constant 0 : i32
    %c0_i32_0 = arith.constant 0 : i32
    return %c0_i32, %1 : i32, i32
  }
  func.func @transform_2(%arg0: i32, %arg1: i32, %arg2: i32) -> (i32, i32) {
    %c0_i32 = arith.constant 0 : i32
    return %arg0, %arg1 : i32, i32
  }
}

</mosaic_0001>

<llo_original>
// kernel: tpu_custom_call.1
$region0: #{tpu_custom_call.1}
  #allocation0 [shape = 'u32[]', space=smem, size = 0x4, offset = 0x4, fixed_abs, tag = 'smem constant byte address 0x4 - core index']
  #allocation1 [shape = 'u32[144,128]{1,0:T(1,128)}', space=vmem, size = 0x12000, scoped, tag = 'internal scratch']
  #allocation2 [shape = 'f32[8,128]{1,0:T(8,128)}', space=vmem, size = 0x1000, scoped, tag = 'scratch operand']
  #allocation3 [shape = 'f32[1,128]{1,0:T(1,128)}', space=vmem, size = 0x200, scoped, tag = 'scratch operand']
  %s0 = inlined_call_operand.hbm [shape: f32[16,128], index: 0, kind: input, shape index: {}]
  %s1 = inlined_call_operand.vmem [shape: f32[1,16], index: 1, kind: input, shape index: {}]
  %s2 = inlined_call_operand.hbm [shape: f32[1,1], index: 2, kind: output, shape index: {}]
  %s3 = sld [smem:[#allocation0]]
  $region30: #{tpu_custom_call.1} parent=0
    _
  %s5 = ssub.s32 1, %s3
  %s6 = scalar_select 0, %s5, %s3
  $region1: #{tpu_custom_call.1} parent=0
    #allocation4 [shape = 'u8[8192]{0}', space=vmem, size = 0x2000, scoped, tag = 'input window, operand 0, single buffered']
    #allocation5 [shape = 's32[1]{0}', space=sflag, size = 0x4, scoped, tag = 'scoped memory for tpu_custom_call.1']
    #allocation6 [shape = 's32[1]{0}', space=sflag, size = 0x4, scoped, tag = 'scoped memory for tpu_custom_call.1']
    #allocation7 [shape = 'u8[512]{0}', space=smem, size = 0x200, scoped, tag = 'output window, operand 0, single buffered']
    %7 = vsyncpa [#allocation5], 0
    %8 = vsyncpa [#allocation6], 0
    // Predicated region
    $region2: #{tpu_custom_call.1} parent=1 // pred_check
      _
    $region3: #{tpu_custom_call.1} parent=1 // pred_check_branch
      %10 = sbr.rel (0) target = $region5
    $region4: #{tpu_custom_call.1} parent=1 // pred_region
      %s11 = sadd.s32 0, 0
      %s12 = smul.u32 2, %s11
      %s14 = ssub.s32 256, 256
      %15 = vsyncadd [#allocation5], %s14
      %s16 = smul.addr %s12, 128
      %s17 = scalar_lea.hbm %s0, %s16
      %s18 = sshll.u32 [#allocation4], 4
      %s19 = int_to_ptr.vmem [resolvable:$true] %s18
      %24 = dma.hbm_to_vmem [thread:$0]  %s17, 256, %s19, [#allocation5], 128, 128, 8
    $region5: #{tpu_custom_call.1} parent=1 // pred_fallthru
      _
    // Predicated region
    $region6: #{tpu_custom_call.1} parent=1 // pred_check
      _
    $region7: #{tpu_custom_call.1} parent=1 // pred_check_branch
      %26 = sbr.rel (0) target = $region9
    $region8: #{tpu_custom_call.1} parent=1 // pred_region
      %s27 = sadd.s32 0, 0
      %p28 = scmp.lt.s32.totalorder %s27, 0
      %s29 = scalar_select %p28, %s27, 0
      %s30 = scalar_lea.vmem %s1, %s29
      %s31 = sadd.s32 0, 0
    $region9: #{tpu_custom_call.1} parent=1 // pred_fallthru
      _
    // Predicated region
    $region10: #{tpu_custom_call.1} parent=1 // pred_check
      _
    $region11: #{tpu_custom_call.1} parent=1 // pred_check_branch
      %33 = sbr.rel (0) target = $region13
    $region12: #{tpu_custom_call.1} parent=1 // pred_region
      %34 = dma.done [#allocation5], 256
    $region13: #{tpu_custom_call.1} parent=1 // pred_fallthru
      _
    %s35 = sadd.s32 0, 0
    %p36 = scmp.lt.s32.totalorder %s35, 0
    %s37 = scalar_select %p36, %s35, 0
    %s38 = scalar_lea.vmem %s1, %s37
    %s39 = sadd.s32 0, 0
    %s40 = smul.u32 2, %s39
    %s41 = sadd.s32 0, 0
    %p42 = scmp.lt.s32.totalorder %s41, 0
    %s43 = scalar_select %p42, %s41, 0
    %s44 = scalar_lea.vmem %s1, %s43
    %s45 = sadd.s32 0, 0
    %p46 = scmp.eq.s32.totalorder 0, 0
    // Predicated region
    $region14: #{tpu_custom_call.1} parent=1 // pred_check
      %p47 = pneg %p46
    $region15: #{tpu_custom_call.1} parent=1 // pred_check_branch
      %49 = sbr.rel (%p47) target = $region17
    $region16: #{tpu_custom_call.1} parent=1 // pred_region
      %50 = vst [vmem:[#allocation2] sm:$0xff] 0.0
      %51 = vst [vmem:[#allocation3] sm:$0x1] 0.0
    $region17: #{tpu_custom_call.1} parent=1 // pred_fallthru
      _
    %v52 = vld [vmem:[#allocation4] sm:$0xff]
    %v53 = vld [vmem:[#allocation4 + $0x8] sm:$0xff]
    %v54 = vld [vmem:[%s44] sm:$0x1]
    %v55 = vmax.f32 %v52, 0.0
    %v56 = vmax.f32 %v53, 0.0
    %v57 = vand.u32 2147483647, %v52
    %v58 = vand.u32 2147483647, %v53
    %v59 = vsub.f32 0.0, %v57
    %v60 = vsub.f32 0.0, %v58
    %v61 = vmul.f32 %v59, 1.442695
    %v62 = vpow.pop %v61
    %v63 = vmul.f32 %v60, 1.442695
    %v64 = vpow.pop %v63
    %v65 = vadd.f32 %v62, 1.0
    %v66 = vlog2.pop %v65
    %v67 = vmul.f32 %v66, 0.6931472
    %v68 = vmul.f32 -0.5, %v62
    %v69 = vadd.f32 %v68, 1.0
    %v70 = vmul.f32 %v69, %v62
    %v71 = vand.u32 2147483647, %v62
    %vm72 = vcmp.lt.f32.partialorder %v71, 0.0004427343
    %v73 = vsel %vm72, %v70, %v67
    %v74 = vadd.f32 %v64, 1.0
    %v75 = vlog2.pop %v74
    %v76 = vmul.f32 %v75, 0.6931472
    %v77 = vmul.f32 -0.5, %v64
    %v78 = vadd.f32 %v77, 1.0
    %v79 = vmul.f32 %v78, %v64
    %v80 = vand.u32 2147483647, %v64
    %vm81 = vcmp.lt.f32.partialorder %v80, 0.0004427343
    %v82 = vsel %vm81, %v79, %v76
    %v83 = vadd.f32 %v55, %v73
    %v84 = vadd.f32 %v56, %v82
    %v85 = vld [vmem:[#allocation2] sm:$0xff]
    %v86 = vadd.f32 %v83, %v84
    %v87 = vadd.f32 %v85, %v86
    %88 = vst [vmem:[#allocation2] sm:$0xff] %v87
    %v89 = vld [vmem:[#allocation3] sm:$0x1]
    %vm90 = vcmask 130048
    %v92 = vsel %vm90, %v54, 0
    %94 = vmatprep.subr.mxu0 0.0
    %v95 = vand.u32 %v52, 4294901760
    %96 = vmatpush1.msra.mxu0 %v95
    %97 = vmatprep.subr.mxu0 0.0
    %v98 = vand.u32 %v53, 4294901760
    %99 = vmatpush1.msra.mxu0 %v98
    %100 = vmatprep.subr.mxu0 0.0
    %101 = vmatpush1.msra.mxu0 0.0
    %102 = vmatprep.subr.mxu0 0.0
    %103 = vmatpush1.msra.mxu0 0.0
    %104 = vmatprep.subr.mxu0 0.0
    %105 = vmatpush1.msra.mxu0 0.0
    %106 = vmatprep.subr.mxu0 0.0
    %107 = vmatpush1.msra.mxu0 0.0
    %108 = vmatprep.subr.mxu0 0.0
    %109 = vmatpush1.msra.mxu0 0.0
    %110 = vmatprep.subr.mxu0 0.0
    %111 = vmatpush1.msra.mxu0 0.0
    %112 = vmatprep.subr.mxu0 0.0
    %113 = vmatpush1.msra.mxu0 0.0
    %114 = vmatprep.subr.mxu0 0.0
    %115 = vmatpush1.msra.mxu0 0.0
    %116 = vmatprep.subr.mxu0 0.0
    %117 = vmatpush1.msra.mxu0 0.0
    %118 = vmatprep.subr.mxu0 0.0
    %119 = vmatpush1.msra.mxu0 0.0
    %120 = vmatprep.subr.mxu0 0.0
    %121 = vmatpush1.msra.mxu0 0.0
    %122 = vmatprep.subr.mxu0 0.0
    %123 = vmatpush1.msra.mxu0 0.0
    %124 = vmatprep.subr.mxu0 0.0
    %125 = vmatpush1.msra.mxu0 0.0
    %126 = vmatprep.subr.mxu0 0.0
    %127 = vmatpush1.msra.mxu0 0.0
    %128 = vmatprep.subr.mxu0 0.0
    %129 = vmatpush1.msra.mxu0 0.0
    %130 = vmatprep.subr.mxu0 0.0
    %131 = vmatpush1.msra.mxu0 0.0
    %132 = vmatprep.subr.mxu0 0.0
    %133 = vmatpush1.msra.mxu0 0.0
    %134 = vmatprep.subr.mxu0 0.0
    %135 = vmatpush1.msra.mxu0 0.0
    %136 = vmatprep.subr.mxu0 0.0
    %137 = vmatpush1.msra.mxu0 0.0
    %138 = vmatprep.subr.mxu0 0.0
    %139 = vmatpush1.msra.mxu0 0.0
    %140 = vmatprep.subr.mxu0 0.0
    %141 = vmatpush1.msra.mxu0 0.0
    %142 = vmatprep.subr.mxu0 0.0
    %143 = vmatpush1.msra.mxu0 0.0
    %144 = vmatprep.subr.mxu0 0.0
    %145 = vmatpush1.msra.mxu0 0.0
    %146 = vmatprep.subr.mxu0 0.0
    %147 = vmatpush1.msra.mxu0 0.0
    %148 = vmatprep.subr.mxu0 0.0
    %149 = vmatpush1.msra.mxu0 0.0
    %150 = vmatprep.subr.mxu0 0.0
    %151 = vmatpush1.msra.mxu0 0.0
    %152 = vmatprep.subr.mxu0 0.0
    %153 = vmatpush1.msra.mxu0 0.0
    %154 = vmatprep.subr.mxu0 0.0
    %155 = vmatpush1.msra.mxu0 0.0
    %156 = vmatprep.subr.mxu0 0.0
    %157 = vmatpush1.msra.mxu0 0.0
    %158 = vmatprep.subr.mxu0 0.0
    %159 = vmatpush1.msra.mxu0 0.0
    %160 = vmatprep.mubr.f32.mxu0 0.0
    %v161 = vand.u32 %v92, 4294901760
    %v162 = vsub.f32 %v92, %v161
    %v163 = vand.u32 %v162, 4294901760
    %v164 = vsub.f32 %v162, %v163
    %v165 = vand.u32 %v164, 4294901760
    %166 = vmatmul.mubr.f32.gmra.mrb[0].mxu0 %v165
    %v167 = vpop.f32.mrb[0].mxu0
    %v168 = vadd.f32 0.0, %v167
    %v169 = vpop.f32.mrb[0].mxu0
    %170 = vdwg.mxu0
    %171 = vmatprep.subr.mxu0 0.0
    %v172 = vand.u32 %v52, 4294901760
    %v173 = vsub.f32 %v52, %v172
    %v174 = vand.u32 %v173, 4294901760
    %v175 = vsub.f32 %v173, %v174
    %v176 = vand.u32 %v175, 4294901760
    %177 = vmatpush1.msra.mxu0 %v176
    %178 = vmatprep.subr.mxu0 0.0
    %v179 = vand.u32 %v53, 4294901760
    %v180 = vsub.f32 %v53, %v179
    %v181 = vand.u32 %v180, 4294901760
    %v182 = vsub.f32 %v180, %v181
    %v183 = vand.u32 %v182, 4294901760
    %184 = vmatpush1.msra.mxu0 %v183
    %185 = vmatprep.subr.mxu0 0.0
    %186 = vmatpush1.msra.mxu0 0.0
    %187 = vmatprep.subr.mxu0 0.0
    %188 = vmatpush1.msra.mxu0 0.0
    %189 = vmatprep.subr.mxu0 0.0
    %190 = vmatpush1.msra.mxu0 0.0
    %191 = vmatprep.subr.mxu0 0.0
    %192 = vmatpush1.msra.mxu0 0.0
    %193 = vmatprep.subr.mxu0 0.0
    %194 = vmatpush1.msra.mxu0 0.0
    %195 = vmatprep.subr.mxu0 0.0
    %196 = vmatpush1.msra.mxu0 0.0
    %197 = vmatprep.subr.mxu0 0.0
    %198 = vmatpush1.msra.mxu0 0.0
    %199 = vmatprep.subr.mxu0 0.0
    %200 = vmatpush1.msra.mxu0 0.0
    %201 = vmatprep.subr.mxu0 0.0
    %202 = vmatpush1.msra.mxu0 0.0
    %203 = vmatprep.subr.mxu0 0.0
    %204 = vmatpush1.msra.mxu0 0.0
    %205 = vmatprep.subr.mxu0 0.0
    %206 = vmatpush1.msra.mxu0 0.0
    %207 = vmatprep.subr.mxu0 0.0
    %208 = vmatpush1.msra.mxu0 0.0
    %209 = vmatprep.subr.mxu0 0.0
    %210 = vmatpush1.msra.mxu0 0.0
    %211 = vmatprep.subr.mxu0 0.0
    %212 = vmatpush1.msra.mxu0 0.0
    %213 = vmatprep.subr.mxu0 0.0
    %214 = vmatpush1.msra.mxu0 0.0
    %215 = vmatprep.subr.mxu0 0.0
    %216 = vmatpush1.msra.mxu0 0.0
    %217 = vmatprep.subr.mxu0 0.0
    %218 = vmatpush1.msra.mxu0 0.0
    %219 = vmatprep.subr.mxu0 0.0
    %220 = vmatpush1.msra.mxu0 0.0
    %221 = vmatprep.subr.mxu0 0.0
    %222 = vmatpush1.msra.mxu0 0.0
    %223 = vmatprep.subr.mxu0 0.0
    %224 = vmatpush1.msra.mxu0 0.0
    %225 = vmatprep.subr.mxu0 0.0
    %226 = vmatpush1.msra.mxu0 0.0
    %227 = vmatprep.subr.mxu0 0.0
    %228 = vmatpush1.msra.mxu0 0.0
    %229 = vmatprep.subr.mxu0 0.0
    %230 = vmatpush1.msra.mxu0 0.0
    %231 = vmatprep.subr.mxu0 0.0
    %232 = vmatpush1.msra.mxu0 0.0
    %233 = vmatprep.subr.mxu0 0.0
    %234 = vmatpush1.msra.mxu0 0.0
    %235 = vmatprep.subr.mxu0 0.0
    %236 = vmatpush1.msra.mxu0 0.0
    %237 = vmatprep.subr.mxu0 0.0
    %238 = vmatpush1.msra.mxu0 0.0
    %239 = vmatprep.subr.mxu0 0.0
    %240 = vmatpush1.msra.mxu0 0.0
    %241 = vmatprep.subr.mxu0 0.0
    %242 = vmatpush1.msra.mxu0 0.0
    %243 = vmatprep.subr.mxu0 0.0
    %244 = vmatpush1.msra.mxu0 0.0
    %245 = vmatprep.mubr.f32.mxu0 0.0
    %v246 = vand.u32 %v92, 4294901760
    %247 = vmatmul.mubr.f32.gmra.mrb[0].mxu0 %v246
    %v248 = vpop.f32.mrb[0].mxu0
    %v249 = vadd.f32 %v168, %v248
    %v250 = vpop.f32.mrb[0].mxu0
    %251 = vdwg.mxu0
    %252 = vmatprep.subr.mxu0 0.0
    %v253 = vand.u32 %v52, 4294901760
    %v254 = vsub.f32 %v52, %v253
    %255 = vmatpush1.msra.mxu0 %v254
    %256 = vmatprep.subr.mxu0 0.0
    %v257 = vand.u32 %v53, 4294901760
    %v258 = vsub.f32 %v53, %v257
    %259 = vmatpush1.msra.mxu0 %v258
    %260 = vmatprep.subr.mxu0 0.0
    %261 = vmatpush1.msra.mxu0 0.0
    %262 = vmatprep.subr.mxu0 0.0
    %263 = vmatpush1.msra.mxu0 0.0
    %264 = vmatprep.subr.mxu0 0.0
    %265 = vmatpush1.msra.mxu0 0.0
    %266 = vmatprep.subr.mxu0 0.0
    %267 = vmatpush1.msra.mxu0 0.0
    %268 = vmatprep.subr.mxu0 0.0
    %269 = vmatpush1.msra.mxu0 0.0
    %270 = vmatprep.subr.mxu0 0.0
    %271 = vmatpush1.msra.mxu0 0.0
    %272 = vmatprep.subr.mxu0 0.0
    %273 = vmatpush1.msra.mxu0 0.0
    %274 = vmatprep.subr.mxu0 0.0
    %275 = vmatpush1.msra.mxu0 0.0
    %276 = vmatprep.subr.mxu0 0.0
    %277 = vmatpush1.msra.mxu0 0.0
    %278 = vmatprep.subr.mxu0 0.0
    %279 = vmatpush1.msra.mxu0 0.0
    %280 = vmatprep.subr.mxu0 0.0
    %281 = vmatpush1.msra.mxu0 0.0
    %282 = vmatprep.subr.mxu0 0.0
    %283 = vmatpush1.msra.mxu0 0.0
    %284 = vmatprep.subr.mxu0 0.0
    %285 = vmatpush1.msra.mxu0 0.0
    %286 = vmatprep.subr.mxu0 0.0
    %287 = vmatpush1.msra.mxu0 0.0
    %288 = vmatprep.subr.mxu0 0.0
    %289 = vmatpush1.msra.mxu0 0.0
    %290 = vmatprep.subr.mxu0 0.0
    %291 = vmatpush1.msra.mxu0 0.0
    %292 = vmatprep.subr.mxu0 0.0
    %293 = vmatpush1.msra.mxu0 0.0
    %294 = vmatprep.subr.mxu0 0.0
    %295 = vmatpush1.msra.mxu0 0.0
    %296 = vmatprep.subr.mxu0 0.0
    %297 = vmatpush1.msra.mxu0 0.0
    %298 = vmatprep.subr.mxu0 0.0
    %299 = vmatpush1.msra.mxu0 0.0
    %300 = vmatprep.subr.mxu0 0.0
    %301 = vmatpush1.msra.mxu0 0.0
    %302 = vmatprep.subr.mxu0 0.0
    %303 = vmatpush1.msra.mxu0 0.0
    %304 = vmatprep.subr.mxu0 0.0
    %305 = vmatpush1.msra.mxu0 0.0
    %306 = vmatprep.subr.mxu0 0.0
    %307 = vmatpush1.msra.mxu0 0.0
    %308 = vmatprep.subr.mxu0 0.0
    %309 = vmatpush1.msra.mxu0 0.0
    %310 = vmatprep.subr.mxu0 0.0
    %311 = vmatpush1.msra.mxu0 0.0
    %312 = vmatprep.subr.mxu0 0.0
    %313 = vmatpush1.msra.mxu0 0.0
    %314 = vmatprep.subr.mxu0 0.0
    %315 = vmatpush1.msra.mxu0 0.0
    %316 = vmatprep.subr.mxu0 0.0
    %317 = vmatpush1.msra.mxu0 0.0
    %318 = vmatprep.subr.mxu0 0.0
    %319 = vmatpush1.msra.mxu0 0.0
    %320 = vmatprep.mubr.f32.mxu0 0.0
    %v321 = vand.u32 %v92, 4294901760
    %v322 = vsub.f32 %v92, %v321
    %323 = vmatmul.mubr.f32.gmra.mrb[0].mxu0 %v322
    %v324 = vpop.f32.mrb[0].mxu0
    %v325 = vadd.f32 %v249, %v324
    %v326 = vpop.f32.mrb[0].mxu0
    %327 = vdwg.mxu0
    %328 = vmatprep.subr.mxu0 0.0
    %v329 = vand.u32 %v52, 4294901760
    %330 = vmatpush1.msra.mxu0 %v329
    %331 = vmatprep.subr.mxu0 0.0
    %v332 = vand.u32 %v53, 4294901760
    %333 = vmatpush1.msra.mxu0 %v332
    %334 = vmatprep.subr.mxu0 0.0
    %335 = vmatpush1.msra.mxu0 0.0
    %336 = vmatprep.subr.mxu0 0.0
    %337 = vmatpush1.msra.mxu0 0.0
    %338 = vmatprep.subr.mxu0 0.0
    %339 = vmatpush1.msra.mxu0 0.0
    %340 = vmatprep.subr.mxu0 0.0
    %341 = vmatpush1.msra.mxu0 0.0
    %342 = vmatprep.subr.mxu0 0.0
    %343 = vmatpush1.msra.mxu0 0.0
    %344 = vmatprep.subr.mxu0 0.0
    %345 = vmatpush1.msra.mxu0 0.0
    %346 = vmatprep.subr.mxu0 0.0
    %347 = vmatpush1.msra.mxu0 0.0
    %348 = vmatprep.subr.mxu0 0.0
    %349 = vmatpush1.msra.mxu0 0.0
    %350 = vmatprep.subr.mxu0 0.0
    %351 = vmatpush1.msra.mxu0 0.0
    %352 = vmatprep.subr.mxu0 0.0
    %353 = vmatpush1.msra.mxu0 0.0
    %354 = vmatprep.subr.mxu0 0.0
    %355 = vmatpush1.msra.mxu0 0.0
    %356 = vmatprep.subr.mxu0 0.0
    %357 = vmatpush1.msra.mxu0 0.0
    %358 = vmatprep.subr.mxu0 0.0
    %359 = vmatpush1.msra.mxu0 0.0
    %360 = vmatprep.subr.mxu0 0.0
    %361 = vmatpush1.msra.mxu0 0.0
    %362 = vmatprep.subr.mxu0 0.0
    %363 = vmatpush1.msra.mxu0 0.0
    %364 = vmatprep.subr.mxu0 0.0
    %365 = vmatpush1.msra.mxu0 0.0
    %366 = vmatprep.subr.mxu0 0.0
    %367 = vmatpush1.msra.mxu0 0.0
    %368 = vmatprep.subr.mxu0 0.0
    %369 = vmatpush1.msra.mxu0 0.0
    %370 = vmatprep.subr.mxu0 0.0
    %371 = vmatpush1.msra.mxu0 0.0
    %372 = vmatprep.subr.mxu0 0.0
    %373 = vmatpush1.msra.mxu0 0.0
    %374 = vmatprep.subr.mxu0 0.0
    %375 = vmatpush1.msra.mxu0 0.0
    %376 = vmatprep.subr.mxu0 0.0
    %377 = vmatpush1.msra.mxu0 0.0
    %378 = vmatprep.subr.mxu0 0.0
    %379 = vmatpush1.msra.mxu0 0.0
    %380 = vmatprep.subr.mxu0 0.0
    %381 = vmatpush1.msra.mxu0 0.0
    %382 = vmatprep.subr.mxu0 0.0
    %383 = vmatpush1.msra.mxu0 0.0
    %384 = vmatprep.subr.mxu0 0.0
    %385 = vmatpush1.msra.mxu0 0.0
    %386 = vmatprep.subr.mxu0 0.0
    %387 = vmatpush1.msra.mxu0 0.0
    %388 = vmatprep.subr.mxu0 0.0
    %389 = vmatpush1.msra.mxu0 0.0
    %390 = vmatprep.subr.mxu0 0.0
    %391 = vmatpush1.msra.mxu0 0.0
    %392 = vmatprep.subr.mxu0 0.0
    %393 = vmatpush1.msra.mxu0 0.0
    %394 = vmatprep.mubr.f32.mxu0 0.0
    %v395 = vand.u32 %v92, 4294901760
    %v396 = vsub.f32 %v92, %v395
    %v397 = vand.u32 %v396, 4294901760
    %398 = vmatmul.mubr.f32.gmra.mrb[0].mxu0 %v397
    %v399 = vpop.f32.mrb[0].mxu0
    %v400 = vadd.f32 %v325, %v399
    %v401 = vpop.f32.mrb[0].mxu0
    %402 = vdwg.mxu0
    %403 = vmatprep.subr.mxu0 0.0
    %v404 = vand.u32 %v52, 4294901760
    %v405 = vsub.f32 %v52, %v404
    %v406 = vand.u32 %v405, 4294901760
    %407 = vmatpush1.msra.mxu0 %v406
    %408 = vmatprep.subr.mxu0 0.0
    %v409 = vand.u32 %v53, 4294901760
    %v410 = vsub.f32 %v53, %v409
    %v411 = vand.u32 %v410, 4294901760
    %412 = vmatpush1.msra.mxu0 %v411
    %413 = vmatprep.subr.mxu0 0.0
    %414 = vmatpush1.msra.mxu0 0.0
    %415 = vmatprep.subr.mxu0 0.0
    %416 = vmatpush1.msra.mxu0 0.0
    %417 = vmatprep.subr.mxu0 0.0
    %418 = vmatpush1.msra.mxu0 0.0
    %419 = vmatprep.subr.mxu0 0.0
    %420 = vmatpush1.msra.mxu0 0.0
    %421 = vmatprep.subr.mxu0 0.0
    %422 = vmatpush1.msra.mxu0 0.0
    %423 = vmatprep.subr.mxu0 0.0
    %424 = vmatpush1.msra.mxu0 0.0
    %425 = vmatprep.subr.mxu0 0.0
    %426 = vmatpush1.msra.mxu0 0.0
    %427 = vmatprep.subr.mxu0 0.0
    %428 = vmatpush1.msra.mxu0 0.0
    %429 = vmatprep.subr.mxu0 0.0
    %430 = vmatpush1.msra.mxu0 0.0
    %431 = vmatprep.subr.mxu0 0.0
    %432 = vmatpush1.msra.mxu0 0.0
    %433 = vmatprep.subr.mxu0 0.0
    %434 = vmatpush1.msra.mxu0 0.0
    %435 = vmatprep.subr.mxu0 0.0
    %436 = vmatpush1.msra.mxu0 0.0
    %437 = vmatprep.subr.mxu0 0.0
    %438 = vmatpush1.msra.mxu0 0.0
    %439 = vmatprep.subr.mxu0 0.0
    %440 = vmatpush1.msra.mxu0 0.0
    %441 = vmatprep.subr.mxu0 0.0
    %442 = vmatpush1.msra.mxu0 0.0
    %443 = vmatprep.subr.mxu0 0.0
    %444 = vmatpush1.msra.mxu0 0.0
    %445 = vmatprep.subr.mxu0 0.0
    %446 = vmatpush1.msra.mxu0 0.0
    %447 = vmatprep.subr.mxu0 0.0
    %448 = vmatpush1.msra.mxu0 0.0
    %449 = vmatprep.subr.mxu0 0.0
    %450 = vmatpush1.msra.mxu0 0.0
    %451 = vmatprep.subr.mxu0 0.0
    %452 = vmatpush1.msra.mxu0 0.0
    %453 = vmatprep.subr.mxu0 0.0
    %454 = vmatpush1.msra.mxu0 0.0
    %455 = vmatprep.subr.mxu0 0.0
    %456 = vmatpush1.msra.mxu0 0.0
    %457 = vmatprep.subr.mxu0 0.0
    %458 = vmatpush1.msra.mxu0 0.0
    %459 = vmatprep.subr.mxu0 0.0
    %460 = vmatpush1.msra.mxu0 0.0
    %461 = vmatprep.subr.mxu0 0.0
    %462 = vmatpush1.msra.mxu0 0.0
    %463 = vmatprep.subr.mxu0 0.0
    %464 = vmatpush1.msra.mxu0 0.0
    %465 = vmatprep.subr.mxu0 0.0
    %466 = vmatpush1.msra.mxu0 0.0
    %467 = vmatprep.subr.mxu0 0.0
    %468 = vmatpush1.msra.mxu0 0.0
    %469 = vmatprep.subr.mxu0 0.0
    %470 = vmatpush1.msra.mxu0 0.0
    %471 = vmatprep.subr.mxu0 0.0
    %472 = vmatpush1.msra.mxu0 0.0
    %473 = vmatprep.mubr.f32.mxu0 0.0
    %v474 = vand.u32 %v92, 4294901760
    %475 = vmatmul.mubr.f32.gmra.mrb[0].mxu0 %v474
    %v476 = vpop.f32.mrb[0].mxu0
    %v477 = vadd.f32 %v400, %v476
    %v478 = vpop.f32.mrb[0].mxu0
    %479 = vdwg.mxu0
    %480 = vmatprep.subr.mxu0 0.0
    %v481 = vand.u32 %v52, 4294901760
    %482 = vmatpush1.msra.mxu0 %v481
    %483 = vmatprep.subr.mxu0 0.0
    %v484 = vand.u32 %v53, 4294901760
    %485 = vmatpush1.msra.mxu0 %v484
    %486 = vmatprep.subr.mxu0 0.0
    %487 = vmatpush1.msra.mxu0 0.0
    %488 = vmatprep.subr.mxu0 0.0
    %489 = vmatpush1.msra.mxu0 0.0
    %490 = vmatprep.subr.mxu0 0.0
    %491 = vmatpush1.msra.mxu0 0.0
    %492 = vmatprep.subr.mxu0 0.0
    %493 = vmatpush1.msra.mxu0 0.0
    %494 = vmatprep.subr.mxu0 0.0
    %495 = vmatpush1.msra.mxu0 0.0
    %496 = vmatprep.subr.mxu0 0.0
    %497 = vmatpush1.msra.mxu0 0.0
    %498 = vmatprep.subr.mxu0 0.0
    %499 = vmatpush1.msra.mxu0 0.0
    %500 = vmatprep.subr.mxu0 0.0
    %501 = vmatpush1.msra.mxu0 0.0
    %502 = vmatprep.subr.mxu0 0.0
    %503 = vmatpush1.msra.mxu0 0.0
    %504 = vmatprep.subr.mxu0 0.0
    %505 = vmatpush1.msra.mxu0 0.0
    %506 = vmatprep.subr.mxu0 0.0
    %507 = vmatpush1.msra.mxu0 0.0
    %508 = vmatprep.subr.mxu0 0.0
    %509 = vmatpush1.msra.mxu0 0.0
    %510 = vmatprep.subr.mxu0 0.0
    %511 = vmatpush1.msra.mxu0 0.0
    %512 = vmatprep.subr.mxu0 0.0
    %513 = vmatpush1.msra.mxu0 0.0
    %514 = vmatprep.subr.mxu0 0.0
    %515 = vmatpush1.msra.mxu0 0.0
    %516 = vmatprep.subr.mxu0 0.0
    %517 = vmatpush1.msra.mxu0 0.0
    %518 = vmatprep.subr.mxu0 0.0
    %519 = vmatpush1.msra.mxu0 0.0
    %520 = vmatprep.subr.mxu0 0.0
    %521 = vmatpush1.msra.mxu0 0.0
    %522 = vmatprep.subr.mxu0 0.0
    %523 = vmatpush1.msra.mxu0 0.0
    %524 = vmatprep.subr.mxu0 0.0
    %525 = vmatpush1.msra.mxu0 0.0
    %526 = vmatprep.subr.mxu0 0.0
    %527 = vmatpush1.msra.mxu0 0.0
    %528 = vmatprep.subr.mxu0 0.0
    %529 = vmatpush1.msra.mxu0 0.0
    %530 = vmatprep.subr.mxu0 0.0
    %531 = vmatpush1.msra.mxu0 0.0
    %532 = vmatprep.subr.mxu0 0.0
    %533 = vmatpush1.msra.mxu0 0.0
    %534 = vmatprep.subr.mxu0 0.0
    %535 = vmatpush1.msra.mxu0 0.0
    %536 = vmatprep.subr.mxu0 0.0
    %537 = vmatpush1.msra.mxu0 0.0
    %538 = vmatprep.subr.mxu0 0.0
    %539 = vmatpush1.msra.mxu0 0.0
    %540 = vmatprep.subr.mxu0 0.0
    %541 = vmatpush1.msra.mxu0 0.0
    %542 = vmatprep.subr.mxu0 0.0
    %543 = vmatpush1.msra.mxu0 0.0
    %544 = vmatprep.subr.mxu0 0.0
    %545 = vmatpush1.msra.mxu0 0.0
    %546 = vmatprep.mubr.f32.mxu0 0.0
    %v547 = vand.u32 %v92, 4294901760
    %548 = vmatmul.mubr.f32.gmra.mrb[0].mxu0 %v547
    %v549 = vpop.f32.mrb[0].mxu0
    %v550 = vadd.f32 %v477, %v549
    %v551 = vpop.f32.mrb[0].mxu0
    %552 = vdwg.mxu0
    %v553 = vadd.f32 %v89, %v550
    %554 = vst [vmem:[#allocation3] sm:$0x1] %v553
    // Predicated region
    $region18: #{tpu_custom_call.1} parent=1 // pred_check
      %p555 = pneg %p46
    $region19: #{tpu_custom_call.1} parent=1 // pred_check_branch
      %557 = sbr.rel (%p555) target = $region21
    $region20: #{tpu_custom_call.1} parent=1 // pred_region
      %v558 = vld [vmem:[#allocation2] sm:$0xff]
      %559 = vadd.xlane.f32.xlu0 %v558
      %v560 = vpop.xlane.xlu0 %559
      %v561 = vrot.slane %v560, 4
      %v562 = vadd.f32 %v560, %v561
      %v563 = vrot.slane %v562, 2
      %v564 = vadd.f32 %v562, %v563
      %v565 = vrot.slane %v564, 1
      %v566 = vadd.f32 %v564, %v565
      %s567 = vtos %v566
      %v568 = vld [vmem:[#allocation3] sm:$0x1]
      %vm569 = vcmask 1040384
      %v570 = vsel %vm569, %v568, 0.0
      %571 = vadd.xlane.f32.xlu0 %v570
      %v572 = vpop.xlane.xlu0 %571
      %v573 = vrot.slane %v572, 4
      %v574 = vadd.f32 %v572, %v573
      %v575 = vrot.slane %v574, 2
      %v576 = vadd.f32 %v574, %v575
      %v577 = vrot.slane %v576, 1
      %v578 = vadd.f32 %v576, %v577
      %s579 = vtos %v578
      %s580 = ssub.f32 %s567, %s579
      %s581 = scalar_lea.smem [#allocation7], 0
      %582 = sst [smem:[%s581]] %s580
    $region21: #{tpu_custom_call.1} parent=1 // pred_fallthru
      _
    // Predicated region
    $region22: #{tpu_custom_call.1} parent=1 // pred_check
      _
    $region23: #{tpu_custom_call.1} parent=1 // pred_check_branch
      %584 = sbr.rel (0) target = $region25
    $region24: #{tpu_custom_call.1} parent=1 // pred_region
      %s586 = ssub.s32 16, 16
      %587 = vsyncadd [#allocation6], %s586
      %590 = dma.smem_to_hbm [#allocation7], 16, %s2, [#allocation6]
    $region25: #{tpu_custom_call.1} parent=1 // pred_fallthru
      _
    // Predicated region
    $region26: #{tpu_custom_call.1} parent=1 // pred_check
      _
    $region27: #{tpu_custom_call.1} parent=1 // pred_check_branch
      %592 = sbr.rel (0) target = $region29
    $region28: #{tpu_custom_call.1} parent=1 // pred_region
      %593 = dma.done [#allocation6], 16
    $region29: #{tpu_custom_call.1} parent=1 // pred_fallthru
      _
    %594 = sfence
    %595 = vsyncpa [#allocation5], 1
    %596 = vsyncpa [#allocation6], 1

</llo_original>
